<compile_context>
chip_gen: v7x
topology: tpu7x:2x2x1
jax: 0.10.0
libtpu: 0.0.40
codegen_flags: <defaults>
</compile_context>

<pallas_src>
import functools

import jax
import jax.numpy as jnp
from jax.experimental import pallas as pl
from jax.experimental.pallas import tpu as pltpu


def _round_up(x, m):
    return (x + m - 1) // m * m


def _cdf_mask_loss_kernel(d1_ref, d2_ref, out_ref, *,
                          b_valid, t_valid, tb, n_steps):
    # Upcast in-kernel (inputs stream HBM->VMEM in their native dtype).
    x = d1_ref[...].astype(jnp.float32) - d2_ref[...].astype(jnp.float32)
    _, t_pad = x.shape

    # Small (1, T_pad) lane-index vector; the per-step wrap masks derived from
    # it are broadcast along sublanes inside the selects (no full-size iota).
    col = jax.lax.broadcasted_iota(jnp.int32, (1, t_pad), 1)

    # Hillis-Steele inclusive prefix sum along the lane (T) axis.
    # roll(x, s)[:, j] == x[:, j - s]; wrapped lanes (j < s) are select-masked,
    # so boundary-block garbage (possibly NaN/Inf) never reaches valid lanes.
    for step in range(n_steps):
        shift = 1 << step
        rolled = pltpu.roll(x, shift=shift, axis=1)
        x = x + jnp.where(col >= shift, rolled, 0.0)

    # Lanes >= t_valid hold garbage / running totals in the (only) partial
    # lane block — zero them with a select (NaN-safe) before squaring.
    if t_pad != t_valid:
        x = jnp.where(col < t_valid, x, 0.0)

    sq = jnp.sum(x * x, axis=-1, keepdims=True)    # (TB, 1)  lane reduce (XLU)
    norms = jnp.sqrt(sq)                           # (TB, 1)  EUP

    # Rows past the end of the batch exist only in the final partial block —
    # select-mask their (possibly NaN) norms out of the partial sum.
    if b_valid % tb != 0:
        row = (pl.program_id(0) * tb
               + jax.lax.broadcasted_iota(jnp.int32, (tb, 1), 0))
        norms = jnp.where(row < b_valid, norms, 0.0)

    out_ref[0, 0] = jnp.sum(norms)                 # per-block partial sum


def cdf_mask_loss(d_1, d_2, *, block_b=None):
    assert d_1.ndim == 2 and d_1.shape == d_2.shape
    B, T = d_1.shape

    T_pad = _round_up(T, 128)                      # lane alignment for roll

    # Batch tile sized from the VMEM budget: 2 inputs x 2 pipeline buffers in
    # the native dtype plus ~3 f32 working copies of the block, kept under the
    # 32 MiB scoped-VMEM limit -> ~2-4 MiB per input block (big DMAs, few
    # ~0.35 us grid steps).
    itemsize = jnp.dtype(d_1.dtype).itemsize
    vmem_budget = 20 * 1024 * 1024
    bytes_per_elem = 2 * 2 * itemsize + 3 * 4
    rows = max(8, (vmem_budget // (T_pad * bytes_per_elem)) // 8 * 8)
    TB = min(rows, _round_up(B, 8))
    if block_b is not None:
        TB = min(TB, max(8, _round_up(block_b, 8)))
    num_blocks = (B + TB - 1) // TB

    n_steps = (T - 1).bit_length() if T > 1 else 0
    kernel = functools.partial(
        _cdf_mask_loss_kernel,
        b_valid=B, t_valid=T, tb=TB, n_steps=n_steps)

    partials = pl.pallas_call(
        kernel,
        out_shape=jax.ShapeDtypeStruct((num_blocks, 1), jnp.float32),
        grid=(num_blocks,),
        in_specs=[
            pl.BlockSpec((TB, T_pad), lambda i: (i, 0)),
            pl.BlockSpec((TB, T_pad), lambda i: (i, 0)),
        ],
        out_specs=pl.BlockSpec((1, 1), lambda i: (i, 0),
                               memory_space=pltpu.MemorySpace.SMEM),
        compiler_params=pltpu.CompilerParams(
            # Independent per-block partial sums -> shardable across the two
            # v7x TensorCores; harmless on single-TC v5e/v6e.
            dimension_semantics=("parallel",),
            vmem_limit_bytes=32 * 1024 * 1024,
        ),
    )(d_1, d_2)

    # Finalize outside the kernel: (pairwise) sum of per-block partials, then
    # the global mean over the true batch size.
    return jnp.sum(partials) / B


def cdf_mask_loss_ref(d_1, d_2):
    """Pure-JAX reference mirroring the PyTorch module.

    d @ triu(ones(T, T)) is exactly an inclusive cumulative sum along T, so
    the reference uses jnp.cumsum (exact f32, no MXU precision ambiguity).
    """
    cdf_1 = jnp.cumsum(d_1.astype(jnp.float32), axis=-1)
    cdf_2 = jnp.cumsum(d_2.astype(jnp.float32), axis=-1)
    return jnp.mean(jnp.linalg.norm(cdf_1 - cdf_2, ord=2, axis=-1))


if __name__ == "__main__":
    key = jax.random.PRNGKey(0)
    k1, k2, k3, k4 = jax.random.split(key, 4)

    # Small shape matching the module's forward (distribution-like rows).
    B, T = 2, 8
    d_1 = jax.nn.softmax(jax.random.normal(k1, (B, T), jnp.float32), axis=-1)
    d_2 = jax.nn.softmax(jax.random.normal(k2, (B, T), jnp.float32), axis=-1)

    out = cdf_mask_loss(d_1, d_2)
    jax.block_until_ready(out)
    ref = cdf_mask_loss_ref(d_1, d_2)
    assert jnp.allclose(out, ref, atol=1e-5, rtol=1e-5), (out, ref)

    # Ragged B and T with a small batch tile: exercises the multi-block
    # "parallel" grid, per-block partial sums, and both garbage-lane and
    # garbage-row masking of unpadded boundary blocks.
    B2, T2 = 20, 200
    e_1 = jax.nn.softmax(jax.random.normal(k3, (B2, T2), jnp.float32), axis=-1)
    e_2 = jax.nn.softmax(jax.random.normal(k4, (B2, T2), jnp.float32), axis=-1)
    out2 = cdf_mask_loss(e_1, e_2, block_b=8)   # 3-block grid
    jax.block_until_ready(out2)
    ref2 = cdf_mask_loss_ref(e_1, e_2)
    assert jnp.allclose(out2, ref2, atol=1e-5, rtol=1e-4), (out2, ref2)

    print("KERNEL_OK")
</pallas_src>

<mosaic_0001>
module attributes {stable_mosaic.version = 11 : i64} {
  func.func @_cdf_mask_loss_kernel(%arg0: i32, %arg1: memref<8x128xf32, #tpu.memory_space<vmem>>, %arg2: memref<8x128xf32, #tpu.memory_space<vmem>>, %arg3: memref<1x1xf32, #tpu.memory_space<smem>>) attributes {dimension_semantics = [#tpu.dimension_semantics<parallel>], iteration_bounds = array<i64: 1>, scalar_prefetch = 0 : i64, scratch_operands = 0 : i64, tpu.core_type = #tpu.core_type<tc>, window_params = [{transform_indices = @transform_0, window_bounds = array<i64: 8, 128>}, {transform_indices = @transform_1, window_bounds = array<i64: 8, 128>}, {transform_indices = @transform_2, window_bounds = array<i64: 1, 1>}]} {
    %c0 = arith.constant 0 : index
    %c0_0 = arith.constant 0 : index
    %0 = vector.load %arg1[%c0, %c0_0] : memref<8x128xf32, #tpu.memory_space<vmem>>, vector<8x128xf32>
    %c0_1 = arith.constant 0 : index
    %c0_2 = arith.constant 0 : index
    %1 = vector.load %arg2[%c0_1, %c0_2] : memref<8x128xf32, #tpu.memory_space<vmem>>, vector<8x128xf32>
    %2 = arith.subf %0, %1 : vector<8x128xf32>
    %3 = tpu.iota {dimensions = array<i32: 1>} : vector<1x128xi32>
    %c1_i32 = arith.constant 1 : i32
    %4 = tpu.dynamic_rotate %2 by %c1_i32 dim 1 : vector<8x128xf32>, i32 -> vector<8x128xf32>
    %c1_i32_3 = arith.constant 1 : i32
    %5 = vector.broadcast %c1_i32_3 : i32 to vector<1x128xi32>
    %6 = arith.cmpi sge, %3, %5 : vector<1x128xi32>
    %cst = arith.constant 0.000000e+00 : f32
    %7 = vector.shape_cast %6 : vector<1x128xi1> to vector<1x128xi1>
    %8 = vector.broadcast %7 : vector<1x128xi1> to vector<8x128xi1>
    %9 = vector.broadcast %cst : f32 to vector<8x128xf32>
    %10 = arith.select %8, %4, %9 : vector<8x128xi1>, vector<8x128xf32>
    %11 = arith.addf %2, %10 : vector<8x128xf32>
    %c2_i32 = arith.constant 2 : i32
    %12 = tpu.dynamic_rotate %11 by %c2_i32 dim 1 : vector<8x128xf32>, i32 -> vector<8x128xf32>
    %c2_i32_4 = arith.constant 2 : i32
    %13 = vector.broadcast %c2_i32_4 : i32 to vector<1x128xi32>
    %14 = arith.cmpi sge, %3, %13 : vector<1x128xi32>
    %cst_5 = arith.constant 0.000000e+00 : f32
    %15 = vector.shape_cast %14 : vector<1x128xi1> to vector<1x128xi1>
    %16 = vector.broadcast %15 : vector<1x128xi1> to vector<8x128xi1>
    %17 = vector.broadcast %cst_5 : f32 to vector<8x128xf32>
    %18 = arith.select %16, %12, %17 : vector<8x128xi1>, vector<8x128xf32>
    %19 = arith.addf %11, %18 : vector<8x128xf32>
    %c4_i32 = arith.constant 4 : i32
    %20 = tpu.dynamic_rotate %19 by %c4_i32 dim 1 : vector<8x128xf32>, i32 -> vector<8x128xf32>
    %c4_i32_6 = arith.constant 4 : i32
    %21 = vector.broadcast %c4_i32_6 : i32 to vector<1x128xi32>
    %22 = arith.cmpi sge, %3, %21 : vector<1x128xi32>
    %cst_7 = arith.constant 0.000000e+00 : f32
    %23 = vector.shape_cast %22 : vector<1x128xi1> to vector<1x128xi1>
    %24 = vector.broadcast %23 : vector<1x128xi1> to vector<8x128xi1>
    %25 = vector.broadcast %cst_7 : f32 to vector<8x128xf32>
    %26 = arith.select %24, %20, %25 : vector<8x128xi1>, vector<8x128xf32>
    %27 = arith.addf %19, %26 : vector<8x128xf32>
    %c8_i32 = arith.constant 8 : i32
    %28 = vector.broadcast %c8_i32 : i32 to vector<1x128xi32>
    %29 = arith.cmpi slt, %3, %28 : vector<1x128xi32>
    %cst_8 = arith.constant 0.000000e+00 : f32
    %30 = vector.shape_cast %29 : vector<1x128xi1> to vector<1x128xi1>
    %31 = vector.broadcast %30 : vector<1x128xi1> to vector<8x128xi1>
    %32 = vector.broadcast %cst_8 : f32 to vector<8x128xf32>
    %33 = arith.select %31, %27, %32 : vector<8x128xi1>, vector<8x128xf32>
    %34 = arith.mulf %33, %33 : vector<8x128xf32>
    %cst_9 = arith.constant dense<0.000000e+00> : vector<8xf32>
    %35 = vector.multi_reduction <add>, %34, %cst_9 [1] : vector<8x128xf32> to vector<8xf32>
    %36 = vector.shape_cast %35 : vector<8xf32> to vector<8x1xf32>
    %37 = math.sqrt %36 : vector<8x1xf32>
    %c8_i32_10 = arith.constant 8 : i32
    %38 = arith.muli %arg0, %c8_i32_10 : i32
    %39 = tpu.iota {dimensions = array<i32: 0>} : vector<8x1xi32>
    %40 = vector.broadcast %38 : i32 to vector<8x1xi32>
    %41 = arith.addi %40, %39 : vector<8x1xi32>
    %c2_i32_11 = arith.constant 2 : i32
    %42 = vector.broadcast %c2_i32_11 : i32 to vector<8x1xi32>
    %43 = arith.cmpi slt, %41, %42 : vector<8x1xi32>
    %cst_12 = arith.constant 0.000000e+00 : f32
    %44 = vector.broadcast %cst_12 : f32 to vector<8x1xf32>
    %45 = arith.select %43, %37, %44 : vector<8x1xi1>, vector<8x1xf32>
    %46 = vector.shape_cast %45 : vector<8x1xf32> to vector<1x8x1xf32>
    %cst_13 = arith.constant dense<0.000000e+00> : vector<1xf32>
    %47 = vector.multi_reduction <add>, %46, %cst_13 [1, 2] : vector<1x8x1xf32> to vector<1xf32>
    %48 = vector.shape_cast %47 : vector<1xf32> to vector<1x1x1xf32>
    %49 = vector.extract %48[0, 0, 0] : f32 from vector<1x1x1xf32>
    %c0_14 = arith.constant 0 : index
    %c0_15 = arith.constant 0 : index
    %50 = memref.load %arg3[%c0_14, %c0_15] : memref<1x1xf32, #tpu.memory_space<smem>>
    memref.store %49, %arg3[%c0_14, %c0_15] : memref<1x1xf32, #tpu.memory_space<smem>>
    return
  }
  func.func @transform_0(%arg0: i32) -> (i32, i32) {
    %c0_i32 = arith.constant 0 : i32
    %c0_i32_0 = arith.constant 0 : i32
    return %arg0, %c0_i32 : i32, i32
  }
  func.func @transform_1(%arg0: i32) -> (i32, i32) {
    %c0_i32 = arith.constant 0 : i32
    %c0_i32_0 = arith.constant 0 : i32
    return %arg0, %c0_i32 : i32, i32
  }
  func.func @transform_2(%arg0: i32) -> (i32, i32) {
    %c0_i32 = arith.constant 0 : i32
    %c0_i32_0 = arith.constant 0 : i32
    return %arg0, %c0_i32 : i32, i32
  }
}

</mosaic_0001>

<llo_original>
// kernel: tpu_custom_call.1
$region0: #{tpu_custom_call.1}
  #allocation0 [shape = 'u32[]', space=smem, size = 0x4, offset = 0x4, fixed_abs, tag = 'smem constant byte address 0x4 - core index']
  #allocation1 [shape = 'u32[144,128]{1,0:T(1,128)}', space=vmem, size = 0x12000, scoped, tag = 'internal scratch']
  %s0 = inlined_call_operand.hbm [shape: f32[2,8], index: 0, kind: input, shape index: {}]
  %s1 = inlined_call_operand.vmem [shape: f32[2,8], index: 1, kind: input, shape index: {}]
  %s2 = inlined_call_operand.hbm [shape: f32[1,1], index: 2, kind: output, shape index: {}]
  %s3 = sld [smem:[#allocation0]]
  $region22: #{tpu_custom_call.1} parent=0
    _
  %s5 = ssub.s32 1, %s3
  %s6 = scalar_select 0, %s5, %s3
  $region1: #{tpu_custom_call.1} parent=0
    #allocation2 [shape = 'u8[4096]{0}', space=vmem, size = 0x1000, scoped, tag = 'input window, operand 0, single buffered']
    #allocation3 [shape = 's32[1]{0}', space=sflag, size = 0x4, scoped, tag = 'scoped memory for tpu_custom_call.1']
    #allocation4 [shape = 's32[1]{0}', space=sflag, size = 0x4, scoped, tag = 'scoped memory for tpu_custom_call.1']
    #allocation5 [shape = 'u8[512]{0}', space=smem, size = 0x200, scoped, tag = 'output window, operand 0, single buffered']
    %7 = vsyncpa [#allocation3], 0
    %8 = vsyncpa [#allocation4], 0
    // Predicated region
    $region2: #{tpu_custom_call.1} parent=1 // pred_check
      _
    $region3: #{tpu_custom_call.1} parent=1 // pred_check_branch
      %10 = sbr.rel (0) target = $region5
    $region4: #{tpu_custom_call.1} parent=1 // pred_region
      %s12 = ssub.s32 128, 32
      %13 = vsyncadd [#allocation3], %s12
      %s14 = sshll.u32 [#allocation2], 4
      %s15 = int_to_ptr.vmem [resolvable:$true] %s14
      %20 = dma.hbm_to_vmem [thread:$0]  %s0, 32, %s15, [#allocation3], 32, 32, 2
    $region5: #{tpu_custom_call.1} parent=1 // pred_fallthru
      _
    // Predicated region
    $region6: #{tpu_custom_call.1} parent=1 // pred_check
      _
    $region7: #{tpu_custom_call.1} parent=1 // pred_check_branch
      %22 = sbr.rel (0) target = $region9
    $region8: #{tpu_custom_call.1} parent=1 // pred_region
      _
    $region9: #{tpu_custom_call.1} parent=1 // pred_fallthru
      _
    // Predicated region
    $region10: #{tpu_custom_call.1} parent=1 // pred_check
      _
    $region11: #{tpu_custom_call.1} parent=1 // pred_check_branch
      %24 = sbr.rel (0) target = $region13
    $region12: #{tpu_custom_call.1} parent=1 // pred_region
      %25 = dma.done [#allocation3], 128
    $region13: #{tpu_custom_call.1} parent=1 // pred_fallthru
      _
    %v26 = vld [vmem:[#allocation2] sm:$0xff]
    %v27 = vld [vmem:[%s1] sm:$0xff]
    %v28 = vsub.f32 %v26, %v27
    %v29 = vlaneseq
    %v30 = vand.u32 %v29, 127
    %31 = vrot.lane.b32.xlu0 %v28, 1
    %v32 = vpop.permute.xlu0 %31
    %vm33 = vcmp.ge.s32.totalorder %v30, 1
    %v34 = vsel %vm33, 1, 0
    %vm35 = vcmp.eq.s32.totalorder %v34, 1
    %v36 = vsel %vm35, %v32, 0.0
    %v37 = vadd.f32 %v28, %v36
    %38 = vrot.lane.b32.xlu0 %v37, 2
    %v39 = vpop.permute.xlu0 %38
    %vm40 = vcmp.ge.s32.totalorder %v30, 2
    %v41 = vsel %vm40, 1, 0
    %vm42 = vcmp.eq.s32.totalorder %v41, 1
    %v43 = vsel %vm42, %v39, 0.0
    %v44 = vadd.f32 %v37, %v43
    %45 = vrot.lane.b32.xlu0 %v44, 4
    %v46 = vpop.permute.xlu0 %45
    %vm47 = vcmp.ge.s32.totalorder %v30, 4
    %v48 = vsel %vm47, 1, 0
    %vm49 = vcmp.eq.s32.totalorder %v48, 1
    %v50 = vsel %vm49, %v46, 0.0
    %v51 = vadd.f32 %v44, %v50
    %vm52 = vcmp.lt.s32.totalorder %v30, 8
    %v53 = vsel %vm52, 1, 0
    %vm54 = vcmp.eq.s32.totalorder %v53, 1
    %v55 = vsel %vm54, %v51, 0.0
    %v56 = vmul.f32 %v55, %v55
    %57 = vadd.xlane.f32.xlu0 %v56
    %v58 = vpop.xlane.xlu0 %57
    %v59 = vrsqrt.pop %v58
    %v60 = vmul.f32 %v58, %v59
    %vm61 = vcmp.eq.f32.partialorder %v58, inf
    %v62 = vsel %vm61, %v58, %v60
    %vm63 = vcmp.eq.f32.partialorder %v58, 0.0
    %v64 = vand.u32 %v58, 2147483648
    %v65 = vsel %vm63, %v64, %v62
    %s66 = smul.u32 0, 8
    %v67 = vlaneseq
    %v68 = vshrl.u32 %v67, 7
    %v69 = vstv %s66
    %v70 = vadd.s32 %v69, %v68
    %vm71 = vcmp.lt.s32.totalorder %v70, 2
    %v72 = vsel %vm71, %v65, 0.0
    %vm73 = vcmask 7168
    %v74 = vsel %vm73, %v72, 0.0
    %75 = vadd.xlane.f32.xlu0 %v74
    %v76 = vpop.xlane.xlu0 %75
    %v77 = vrot.slane %v76, 4
    %v78 = vadd.f32 %v76, %v77
    %v79 = vrot.slane %v78, 2
    %v80 = vadd.f32 %v78, %v79
    %v81 = vrot.slane %v80, 1
    %v82 = vadd.f32 %v80, %v81
    %s83 = vtos %v82
    %s84 = scalar_lea.smem [#allocation5], 0
    %85 = sst [smem:[%s84]] %s83
    // Predicated region
    $region14: #{tpu_custom_call.1} parent=1 // pred_check
      _
    $region15: #{tpu_custom_call.1} parent=1 // pred_check_branch
      %87 = sbr.rel (0) target = $region17
    $region16: #{tpu_custom_call.1} parent=1 // pred_region
      %s89 = ssub.s32 16, 16
      %90 = vsyncadd [#allocation4], %s89
      %93 = dma.smem_to_hbm [#allocation5], 16, %s2, [#allocation4]
    $region17: #{tpu_custom_call.1} parent=1 // pred_fallthru
      _
    // Predicated region
    $region18: #{tpu_custom_call.1} parent=1 // pred_check
      _
    $region19: #{tpu_custom_call.1} parent=1 // pred_check_branch
      %95 = sbr.rel (0) target = $region21
    $region20: #{tpu_custom_call.1} parent=1 // pred_region
      %96 = dma.done [#allocation4], 16
    $region21: #{tpu_custom_call.1} parent=1 // pred_fallthru
      _
    %97 = sfence
    %98 = vsyncpa [#allocation3], 1
    %99 = vsyncpa [#allocation4], 1

</llo_original>
